<compile_context>
chip_gen: v7x
topology: tpu7x:2x2x1
jax: 0.10.0
libtpu: 0.0.40
codegen_flags: <defaults>
</compile_context>

<pallas_src>
import jax
import jax.numpy as jnp
from jax.experimental import pallas as pl
from jax.experimental.pallas import tpu as pltpu

LANES = 128
TARGET_BLOCK_BYTES = 1 << 20  # ~1 MiB per block


def _sublane_align(dtype) -> int:
    """Minimum sublane packing for the dtype: 8 for f32, 16 for bf16, 32 for int8/fp8."""
    itemsize = jnp.dtype(dtype).itemsize
    return max(8, 32 // itemsize)


def _dispact_kernel(x_ref, o_ref):
    # Compute in f32 (safe on v5e which lacks bf16 VPU/EUP; no-op cast for f32).
    x = x_ref[...].astype(jnp.float32)
    # PyTorch F.softplus: beta=1, threshold=20 -> x if x > 20 else log1p(exp(x))
    sp = jnp.where(x > 20.0, x, jnp.log1p(jnp.exp(jnp.minimum(x, 20.0))))
    # torch.clamp(min=0.001, max=1000.0)
    o_ref[...] = jnp.clip(sp, 0.001, 1000.0).astype(o_ref.dtype)


def disp_act(x):
    """Apply clamp(softplus(x), 0.001, 1000.0) elementwise via a Pallas TPU kernel."""
    orig_shape = x.shape
    orig_dtype = x.dtype
    n = x.size
    if n == 0:
        return x

    itemsize = jnp.dtype(orig_dtype).itemsize
    sub = _sublane_align(orig_dtype)

    # View the tensor as a lane-dense (rows, 128) slab.  Fast path: no pad, no
    # extra HBM pass when the element count is 128-divisible.
    if n % LANES == 0:
        rows = n // LANES
        x2d = x.reshape(rows, LANES)
        padded = False
    else:
        rows = pl.cdiv(n, LANES)
        pad = rows * LANES - n
        x_flat = jnp.concatenate(
            [jnp.ravel(x), jnp.zeros((pad,), dtype=orig_dtype)]
        )
        x2d = x_flat.reshape(rows, LANES)
        padded = True

    # Pick a block of ~TARGET_BLOCK_BYTES, aligned to the dtype's sublane
    # packing.  Small inputs use a single full-extent block (always legal).
    target_rows = max(sub, (TARGET_BLOCK_BYTES // (LANES * itemsize)) // sub * sub)
    if rows <= target_rows:
        block_rows = rows  # full array extent -> single block, no alignment issue
    else:
        block_rows = target_rows

    grid = (pl.cdiv(rows, block_rows),)

    out2d = pl.pallas_call(
        _dispact_kernel,
        out_shape=jax.ShapeDtypeStruct((rows, LANES), orig_dtype),
        grid_spec=pltpu.PrefetchScalarGridSpec(
            num_scalar_prefetch=0,
            grid=grid,
            in_specs=[pl.BlockSpec((block_rows, LANES), lambda i: (i, 0))],
            out_specs=pl.BlockSpec((block_rows, LANES), lambda i: (i, 0)),
        ),
        compiler_params=pltpu.CompilerParams(
            dimension_semantics=("parallel",),
        ),
    )(x2d)

    if padded:
        return out2d.reshape(-1)[:n].reshape(orig_shape)
    return out2d.reshape(orig_shape)


if __name__ == "__main__":
    key = jax.random.PRNGKey(0)
    # Shape consistent with a conv-style NCHW activation tensor.
    x = jax.random.normal(key, (2, 4, 16, 16), dtype=jnp.float32) * 10.0

    y = disp_act(x)
    jax.block_until_ready(y)

    # Reference check in plain JAX (same math as PyTorch F.softplus + clamp).
    sp_ref = jnp.where(x > 20.0, x, jnp.log1p(jnp.exp(jnp.minimum(x, 20.0))))
    y_ref = jnp.clip(sp_ref, 0.001, 1000.0)
    assert y.shape == x.shape and y.dtype == x.dtype
    assert jnp.max(jnp.abs(y - y_ref)) < 1e-5

    print("KERNEL_OK")
</pallas_src>

<mosaic_0001>
module attributes {stable_mosaic.version = 11 : i64} {
  func.func @_dispact_kernel(%arg0: i32, %arg1: memref<16x128xf32, #tpu.memory_space<vmem>>, %arg2: memref<16x128xf32, #tpu.memory_space<vmem>>) attributes {dimension_semantics = [#tpu.dimension_semantics<parallel>], iteration_bounds = array<i64: 1>, scalar_prefetch = 0 : i64, scratch_operands = 0 : i64, tpu.core_type = #tpu.core_type<tc>, window_params = [{transform_indices = @transform_0, window_bounds = array<i64: 16, 128>}, {transform_indices = @transform_1, window_bounds = array<i64: 16, 128>}]} {
    %c0 = arith.constant 0 : index
    %c0_0 = arith.constant 0 : index
    %0 = vector.load %arg1[%c0, %c0_0] : memref<16x128xf32, #tpu.memory_space<vmem>>, vector<16x128xf32>
    %cst = arith.constant 2.000000e+01 : f32
    %1 = vector.broadcast %cst : f32 to vector<16x128xf32>
    %2 = arith.cmpf ogt, %0, %1 : vector<16x128xf32>
    %cst_1 = arith.constant 2.000000e+01 : f32
    %3 = vector.broadcast %cst_1 : f32 to vector<16x128xf32>
    %4 = arith.minimumf %0, %3 : vector<16x128xf32>
    %5 = math.exp %4 : vector<16x128xf32>
    %6 = math.log1p %5 : vector<16x128xf32>
    %7 = arith.select %2, %0, %6 : vector<16x128xi1>, vector<16x128xf32>
    %cst_2 = arith.constant 1.000000e-03 : f32
    %cst_3 = arith.constant 1.000000e+03 : f32
    %8 = vector.broadcast %cst_2 : f32 to vector<16x128xf32>
    %9 = arith.maximumf %8, %7 : vector<16x128xf32>
    %10 = vector.broadcast %cst_3 : f32 to vector<16x128xf32>
    %11 = arith.minimumf %10, %9 : vector<16x128xf32>
    %c0_4 = arith.constant 0 : index
    %c0_5 = arith.constant 0 : index
    %12 = vector.load %arg2[%c0_4, %c0_5] : memref<16x128xf32, #tpu.memory_space<vmem>>, vector<16x128xf32>
    tpu.vector_store %arg2[%c0_4, %c0_5], %11 {strides = array<i32>} : memref<16x128xf32, #tpu.memory_space<vmem>>, vector<16x128xf32>,
    return
  }
  func.func @transform_0(%arg0: i32) -> (i32, i32) {
    %c0_i32 = arith.constant 0 : i32
    %c0_i32_0 = arith.constant 0 : i32
    return %arg0, %c0_i32 : i32, i32
  }
  func.func @transform_1(%arg0: i32) -> (i32, i32) {
    %c0_i32 = arith.constant 0 : i32
    %c0_i32_0 = arith.constant 0 : i32
    return %arg0, %c0_i32 : i32, i32
  }
}

</mosaic_0001>

<llo_original>
// kernel: tpu_custom_call.1
$region0: #{tpu_custom_call.1}
  #allocation0 [shape = 'u32[]', space=smem, size = 0x4, offset = 0x4, fixed_abs, tag = 'smem constant byte address 0x4 - core index']
  #allocation1 [shape = 'u32[144,128]{1,0:T(1,128)}', space=vmem, size = 0x12000, scoped, tag = 'internal scratch']
  %s0 = inlined_call_operand.hbm [shape: f32[16,128], index: 0, kind: input, shape index: {}]
  %s1 = inlined_call_operand.hbm [shape: f32[16,128], index: 1, kind: output, shape index: {}]
  %s2 = sld [smem:[#allocation0]]
  $region18: #{tpu_custom_call.1} parent=0
    _
  %s4 = ssub.s32 1, %s2
  %s5 = scalar_select 0, %s4, %s2
  $region1: #{tpu_custom_call.1} parent=0
    #allocation2 [shape = 'u8[8192]{0}', space=vmem, size = 0x2000, scoped, tag = 'input window, operand 0, single buffered']
    #allocation3 [shape = 's32[1]{0}', space=sflag, size = 0x4, scoped, tag = 'scoped memory for tpu_custom_call.1']
    #allocation4 [shape = 's32[1]{0}', space=sflag, size = 0x4, scoped, tag = 'scoped memory for tpu_custom_call.1']
    #allocation5 [shape = 'u8[8192]{0}', space=vmem, size = 0x2000, scoped, tag = 'output window, operand 0, single buffered']
    %6 = vsyncpa [#allocation3], 0
    %7 = vsyncpa [#allocation4], 0
    // Predicated region
    $region2: #{tpu_custom_call.1} parent=1 // pred_check
      _
    $region3: #{tpu_custom_call.1} parent=1 // pred_check_branch
      %9 = sbr.rel (0) target = $region5
    $region4: #{tpu_custom_call.1} parent=1 // pred_region
      %s11 = ssub.s32 256, 256
      %12 = vsyncadd [#allocation3], %s11
      %s13 = sshll.u32 [#allocation2], 4
      %s14 = int_to_ptr.vmem [resolvable:$true] %s13
      %19 = dma.hbm_to_vmem [thread:$0]  %s0, 256, %s14, [#allocation3], 128, 128, 8
    $region5: #{tpu_custom_call.1} parent=1 // pred_fallthru
      _
    // Predicated region
    $region6: #{tpu_custom_call.1} parent=1 // pred_check
      _
    $region7: #{tpu_custom_call.1} parent=1 // pred_check_branch
      %21 = sbr.rel (0) target = $region9
    $region8: #{tpu_custom_call.1} parent=1 // pred_region
      %22 = dma.done [#allocation3], 256
    $region9: #{tpu_custom_call.1} parent=1 // pred_fallthru
      _
    %v23 = vld [vmem:[#allocation2] sm:$0xff]
    %v24 = vld [vmem:[#allocation2 + $0x8] sm:$0xff]
    %vm25 = vcmp.gt.f32.partialorder %v23, 20.0
    %vm26 = vcmp.gt.f32.partialorder %v24, 20.0
    %v27 = vmin.f32 %v23, 20.0
    %v28 = vmin.f32 %v24, 20.0
    %v29 = vmul.f32 %v27, 1.442695
    %v30 = vpow.pop %v29
    %v31 = vmul.f32 %v28, 1.442695
    %v32 = vpow.pop %v31
    %v33 = vadd.f32 %v30, 1.0
    %v34 = vlog2.pop %v33
    %v35 = vmul.f32 %v34, 0.6931472
    %v36 = vmul.f32 -0.5, %v30
    %v37 = vadd.f32 %v36, 1.0
    %v38 = vmul.f32 %v37, %v30
    %v39 = vand.u32 2147483647, %v30
    %vm40 = vcmp.lt.f32.partialorder %v39, 0.0004427343
    %v41 = vsel %vm40, %v38, %v35
    %v42 = vadd.f32 %v32, 1.0
    %v43 = vlog2.pop %v42
    %v44 = vmul.f32 %v43, 0.6931472
    %v45 = vmul.f32 -0.5, %v32
    %v46 = vadd.f32 %v45, 1.0
    %v47 = vmul.f32 %v46, %v32
    %v48 = vand.u32 2147483647, %v32
    %vm49 = vcmp.lt.f32.partialorder %v48, 0.0004427343
    %v50 = vsel %vm49, %v47, %v44
    %v51 = vsel %vm25, %v23, %v41
    %v52 = vsel %vm26, %v24, %v50
    %v53 = vmax.f32 %v51, 0.001
    %v54 = vmax.f32 %v52, 0.001
    %v55 = vmin.f32 %v53, 1000.0
    %v56 = vmin.f32 %v54, 1000.0
    %57 = vst [vmem:[#allocation5] sm:$0xff] %v55
    %58 = vst [vmem:[#allocation5 + $0x8] sm:$0xff] %v56
    // Predicated region
    $region10: #{tpu_custom_call.1} parent=1 // pred_check
      _
    $region11: #{tpu_custom_call.1} parent=1 // pred_check_branch
      %60 = sbr.rel (0) target = $region13
    $region12: #{tpu_custom_call.1} parent=1 // pred_region
      %s62 = ssub.s32 256, 256
      %63 = vsyncadd [#allocation4], %s62
      %s64 = sshll.u32 [#allocation5], 4
      %s65 = int_to_ptr.vmem [resolvable:$true] %s64
      %70 = dma.vmem_to_hbm [thread:$0]  %s65, 256, %s1, [#allocation4], 128, 128, 8
    $region13: #{tpu_custom_call.1} parent=1 // pred_fallthru
      _
    // Predicated region
    $region14: #{tpu_custom_call.1} parent=1 // pred_check
      _
    $region15: #{tpu_custom_call.1} parent=1 // pred_check_branch
      %72 = sbr.rel (0) target = $region17
    $region16: #{tpu_custom_call.1} parent=1 // pred_region
      %73 = dma.done [#allocation4], 256
    $region17: #{tpu_custom_call.1} parent=1 // pred_fallthru
      _
    %74 = vsyncpa [#allocation3], 1
    %75 = vsyncpa [#allocation4], 1

</llo_original>
